<compile_context>
chip_gen: v7x
topology: tpu7x:2x2x1
jax: 0.10.0
libtpu: 0.0.40
codegen_flags: <defaults>
</compile_context>

<pallas_src>
import functools

import jax
import jax.numpy as jnp
from jax import lax
from jax.experimental import pallas as pl
from jax.experimental.pallas import tpu as pltpu


def _round_up(x, m):
    return ((x + m - 1) // m) * m


def _choose_batch_tile(batch, tile_b):
    """Pick the batch tile (lane dimension of the transposed layout).

    * full-extent (== batch) when batch <= 128: always a legal block, 1 step,
    * otherwise a multiple of 128 lanes (which is also a multiple of 8
      sublanes for the batch-major state block), as large as tile_b to
      amortize per-step overhead, but capped at ~batch/2 so the grid has at
      least 2 steps for v7x megacore sharding.
    """
    if batch <= 128:
        return batch
    half = _round_up(pl.cdiv(batch, 2), 128)
    return max(128, min(_round_up(tile_b, 128), half))


def _mlp_policy_kernel(x_ref, w1t_ref, b1_ref, w2t_ref, b2_ref, w3t_ref, b3_ref,
                       out_ref, *, activation):
    """One batch tile, batch-in-lanes: 3 MXU matmuls (f32 acc) + activations."""

    def act(v):  # f32 in, f32 out (VPU / EUP)
        if activation == "relu":
            return jnp.maximum(v, 0.0)
        return jnp.tanh(v)

    mxu_dtype = w1t_ref.dtype  # bf16 (or f32 if use_bf16=False)

    # State tile is batch-major (tb, num_inputs); cast to the MXU dtype here
    # (no-op if the caller already supplies bf16 states).
    x = x_ref[...].astype(mxu_dtype)

    # layer 1: h1^T = W1^T @ x^T, contracting the LAST dims of both operands
    # so x^T is never materialized.  Output (hidden, tb): batch in lanes.
    h = lax.dot_general(w1t_ref[...], x,
                        dimension_numbers=(((1,), (1,)), ((), ())),
                        preferred_element_type=jnp.float32)
    h = act(h + b1_ref[...]).astype(mxu_dtype)

    # layer 2: (hidden, hidden) @ (hidden, tb) -> (hidden, tb)
    h = jnp.dot(w2t_ref[...], h, preferred_element_type=jnp.float32)
    h = act(h + b2_ref[...]).astype(mxu_dtype)

    # layer 3 -> logits^T (num_actions, tb); no activation (matches torch forward)
    logits_t = jnp.dot(w3t_ref[...], h, preferred_element_type=jnp.float32)
    logits_t = logits_t + b3_ref[...]

    out_ref[...] = logits_t.astype(out_ref.dtype)   # lane-dense store


def softmax_policy_forward(state, params, activation="relu", *,
                           tile_b=8192, use_bf16=True):
    """Fused MLP forward producing logits.

    state: (B, num_inputs) float32 (or bfloat16).  Returns (B, num_actions) f32.
    """
    if activation not in ("relu", "tanh"):
        raise ValueError(f"unknown activation {activation}")

    w1, b1, w2, b2, w3, b3 = (params["w1"], params["b1"], params["w2"],
                              params["b2"], params["w3"], params["b3"])
    B, num_inputs = state.shape
    hidden_dim = w1.shape[1]
    num_actions = w3.shape[1]

    mxu_dtype = jnp.bfloat16 if use_bf16 else jnp.float32
    # Transpose + cast the (tiny) parameters once in the wrapper so every
    # in-kernel matmul is already in W^T-on-the-left form.
    w1t = w1.T.astype(mxu_dtype)                      # (hidden, num_inputs)
    w2t = w2.T.astype(mxu_dtype)                      # (hidden, hidden)
    w3t = w3.T.astype(mxu_dtype)                      # (num_actions, hidden)
    # Biases stay f32 (added to the f32 MXU accumulator), as (features, 1)
    # columns so they broadcast across the lane (batch) axis.
    b1c = b1.reshape(hidden_dim, 1).astype(jnp.float32)
    b2c = b2.reshape(hidden_dim, 1).astype(jnp.float32)
    b3c = b3.reshape(num_actions, 1).astype(jnp.float32)

    tb = _choose_batch_tile(B, tile_b)
    grid = (pl.cdiv(B, tb),)

    resident = lambda i: (0, 0)  # constant index_map -> fetched once, VMEM-resident

    flops = 2 * B * (num_inputs * hidden_dim
                     + hidden_dim * hidden_dim
                     + hidden_dim * num_actions)
    transcendentals = 2 * B * hidden_dim if activation == "tanh" else 0
    bytes_accessed = (
        B * num_inputs * state.dtype.itemsize             # state read
        + B * num_actions * 4                             # logits write (f32)
        + sum(int(a.size) * a.dtype.itemsize
              for a in (w1t, b1c, w2t, b2c, w3t, b3c)))   # resident params

    kernel = functools.partial(_mlp_policy_kernel, activation=activation)

    logits_t = pl.pallas_call(
        kernel,
        out_shape=jax.ShapeDtypeStruct((num_actions, B), jnp.float32),
        grid=grid,
        in_specs=[
            pl.BlockSpec((tb, num_inputs), lambda i: (i, 0)),        # state tile (batch-major)
            pl.BlockSpec((hidden_dim, num_inputs), resident),        # w1^T
            pl.BlockSpec((hidden_dim, 1), resident),                 # b1 column
            pl.BlockSpec((hidden_dim, hidden_dim), resident),        # w2^T
            pl.BlockSpec((hidden_dim, 1), resident),                 # b2 column
            pl.BlockSpec((num_actions, hidden_dim), resident),       # w3^T
            pl.BlockSpec((num_actions, 1), resident),                # b3 column
        ],
        out_specs=pl.BlockSpec((num_actions, tb), lambda i: (0, i)),  # logits^T tile
        compiler_params=pltpu.CompilerParams(
            dimension_semantics=("parallel",),     # v7x: shard batch over both TCs
        ),
        cost_estimate=pl.CostEstimate(
            flops=flops,
            transcendentals=transcendentals,
            bytes_accessed=bytes_accessed,
        ),
    )(state, w1t, b1c, w2t, b2c, w3t, b3c)

    # Back to the module's (B, num_actions) layout.  This is a tiny
    # (B * num_actions * 4 byte) XLA transpose — ~1/5 of the state-read
    # traffic; the heavy stream (state) is never transposed or re-cast
    # outside the kernel.
    return logits_t.T


def init_params(num_inputs, num_actions, hidden_dim, key):
    """Deterministic synthetic parameter init (xavier-uniform-ish)."""
    k1, k2, k3 = jax.random.split(key, 3)

    def xavier(k, fan_in, fan_out):
        limit = jnp.sqrt(6.0 / (fan_in + fan_out))
        return jax.random.uniform(k, (fan_in, fan_out), jnp.float32, -limit, limit)

    return {
        "w1": xavier(k1, num_inputs, hidden_dim),
        "b1": jnp.zeros((1, hidden_dim), jnp.float32),
        "w2": xavier(k2, hidden_dim, hidden_dim),
        "b2": jnp.zeros((1, hidden_dim), jnp.float32),
        "w3": xavier(k3, hidden_dim, num_actions),
        "b3": jnp.zeros((1, num_actions), jnp.float32),
    }


def reference_forward(state, params, activation="relu", use_bf16=True):
    """Pure-JAX reference with the same bf16-operand / f32-accumulate recipe."""
    mxu = jnp.bfloat16 if use_bf16 else jnp.float32
    act = jnp.tanh if activation == "tanh" else (lambda v: jnp.maximum(v, 0.0))

    def dense(x, w, b):
        return jnp.dot(x.astype(mxu), w.astype(mxu),
                       preferred_element_type=jnp.float32) + b.astype(jnp.float32)

    h = act(dense(state, params["w1"], params["b1"]))
    h = act(dense(h, params["w2"], params["b2"]))
    return dense(h, params["w3"], params["b3"])


if __name__ == "__main__":
    # Small shapes consistent with the module: a batch of states -> action logits.
    batch, num_inputs, hidden_dim, num_actions = 256, 16, 32, 4
    activation = "relu"

    key = jax.random.PRNGKey(0)
    kx, kp = jax.random.split(key)
    state = jax.random.normal(kx, (batch, num_inputs), jnp.float32)
    params = init_params(num_inputs, num_actions, hidden_dim, kp)

    # At batch=256 the tile chooser picks tb=128 -> a 2-step grid, exercising
    # multi-step pipelining and the v7x megacore path.
    logits = softmax_policy_forward(state, params, activation)
    logits = jax.block_until_ready(logits)

    ref = reference_forward(state, params, activation)
    assert logits.shape == (batch, num_actions)
    assert jnp.allclose(logits, ref, atol=1e-2, rtol=1e-2), "mismatch vs reference"

    print("KERNEL_OK")
</pallas_src>

<mosaic_0001>
module attributes {stable_mosaic.version = 11 : i64} {
  func.func @_mlp_policy_kernel(%arg0: i32, %arg1: memref<128x16xf32, #tpu.memory_space<vmem>>, %arg2: memref<32x16xbf16, #tpu.memory_space<vmem>>, %arg3: memref<32x1xf32, #tpu.memory_space<vmem>>, %arg4: memref<32x32xbf16, #tpu.memory_space<vmem>>, %arg5: memref<32x1xf32, #tpu.memory_space<vmem>>, %arg6: memref<4x32xbf16, #tpu.memory_space<vmem>>, %arg7: memref<4x1xf32, #tpu.memory_space<vmem>>, %arg8: memref<4x128xf32, #tpu.memory_space<vmem>>) attributes {dimension_semantics = [#tpu.dimension_semantics<parallel>], iteration_bounds = array<i64: 2>, scalar_prefetch = 0 : i64, scratch_operands = 0 : i64, tpu.core_type = #tpu.core_type<tc>, window_params = [{transform_indices = @transform_0, window_bounds = array<i64: 128, 16>}, {pipeline_mode = #tpu.pipeline_mode<synchronous>, transform_indices = @transform_1, window_bounds = array<i64: 32, 16>}, {pipeline_mode = #tpu.pipeline_mode<synchronous>, transform_indices = @transform_2, window_bounds = array<i64: 32, 1>}, {pipeline_mode = #tpu.pipeline_mode<synchronous>, transform_indices = @transform_3, window_bounds = array<i64: 32, 32>}, {pipeline_mode = #tpu.pipeline_mode<synchronous>, transform_indices = @transform_4, window_bounds = array<i64: 32, 1>}, {pipeline_mode = #tpu.pipeline_mode<synchronous>, transform_indices = @transform_5, window_bounds = array<i64: 4, 32>}, {pipeline_mode = #tpu.pipeline_mode<synchronous>, transform_indices = @transform_6, window_bounds = array<i64: 4, 1>}, {transform_indices = @transform_7, window_bounds = array<i64: 4, 128>}]} {
    %c0 = arith.constant 0 : index
    %c0_0 = arith.constant 0 : index
    %0 = vector.load %arg1[%c0, %c0_0] : memref<128x16xf32, #tpu.memory_space<vmem>>, vector<128x16xf32>
    %1 = arith.truncf %0 : vector<128x16xf32> to vector<128x16xbf16>
    %c0_1 = arith.constant 0 : index
    %c0_2 = arith.constant 0 : index
    %2 = vector.load %arg2[%c0_1, %c0_2] : memref<32x16xbf16, #tpu.memory_space<vmem>>, vector<32x16xbf16>
    %cst = arith.constant dense<0.000000e+00> : vector<32x128xf32>
    %3 = tpu.matmul %2, %1, %cst {dimension_numbers = #tpu.dot_dimension_numbers<[1], [1], [0], [0], [0, 0, 1, 0], [], []>} : vector<32x16xbf16>, vector<128x16xbf16>, vector<32x128xf32> -> vector<32x128xf32>
    %c0_3 = arith.constant 0 : index
    %c0_4 = arith.constant 0 : index
    %4 = vector.load %arg3[%c0_3, %c0_4] : memref<32x1xf32, #tpu.memory_space<vmem>>, vector<32x1xf32>
    %5 = vector.broadcast %4 : vector<32x1xf32> to vector<32x128xf32>
    %6 = arith.addf %3, %5 : vector<32x128xf32>
    %cst_5 = arith.constant 0.000000e+00 : f32
    %7 = vector.broadcast %cst_5 : f32 to vector<32x128xf32>
    %8 = arith.maximumf %6, %7 : vector<32x128xf32>
    %9 = arith.truncf %8 : vector<32x128xf32> to vector<32x128xbf16>
    %c0_6 = arith.constant 0 : index
    %c0_7 = arith.constant 0 : index
    %10 = vector.load %arg4[%c0_6, %c0_7] : memref<32x32xbf16, #tpu.memory_space<vmem>>, vector<32x32xbf16>
    %cst_8 = arith.constant dense<0.000000e+00> : vector<32x128xf32>
    %11 = tpu.matmul %10, %9, %cst_8 {dimension_numbers = #tpu.dot_dimension_numbers<[1], [0], [0], [1], [0, 0, 1, 1], [], []>} : vector<32x32xbf16>, vector<32x128xbf16>, vector<32x128xf32> -> vector<32x128xf32>
    %c0_9 = arith.constant 0 : index
    %c0_10 = arith.constant 0 : index
    %12 = vector.load %arg5[%c0_9, %c0_10] : memref<32x1xf32, #tpu.memory_space<vmem>>, vector<32x1xf32>
    %13 = vector.broadcast %12 : vector<32x1xf32> to vector<32x128xf32>
    %14 = arith.addf %11, %13 : vector<32x128xf32>
    %cst_11 = arith.constant 0.000000e+00 : f32
    %15 = vector.broadcast %cst_11 : f32 to vector<32x128xf32>
    %16 = arith.maximumf %14, %15 : vector<32x128xf32>
    %17 = arith.truncf %16 : vector<32x128xf32> to vector<32x128xbf16>
    %c0_12 = arith.constant 0 : index
    %c0_13 = arith.constant 0 : index
    %18 = vector.load %arg6[%c0_12, %c0_13] : memref<4x32xbf16, #tpu.memory_space<vmem>>, vector<4x32xbf16>
    %cst_14 = arith.constant dense<0.000000e+00> : vector<4x128xf32>
    %19 = tpu.matmul %18, %17, %cst_14 {dimension_numbers = #tpu.dot_dimension_numbers<[1], [0], [0], [1], [0, 0, 1, 1], [], []>} : vector<4x32xbf16>, vector<32x128xbf16>, vector<4x128xf32> -> vector<4x128xf32>
    %c0_15 = arith.constant 0 : index
    %c0_16 = arith.constant 0 : index
    %20 = vector.load %arg7[%c0_15, %c0_16] : memref<4x1xf32, #tpu.memory_space<vmem>>, vector<4x1xf32>
    %21 = vector.broadcast %20 : vector<4x1xf32> to vector<4x128xf32>
    %22 = arith.addf %19, %21 : vector<4x128xf32>
    %c0_17 = arith.constant 0 : index
    %c0_18 = arith.constant 0 : index
    %23 = vector.load %arg8[%c0_17, %c0_18] : memref<4x128xf32, #tpu.memory_space<vmem>>, vector<4x128xf32>
    tpu.vector_store %arg8[%c0_17, %c0_18], %22 {strides = array<i32>} : memref<4x128xf32, #tpu.memory_space<vmem>>, vector<4x128xf32>,
    return
  }
  func.func @transform_0(%arg0: i32) -> (i32, i32) {
    %c0_i32 = arith.constant 0 : i32
    %c0_i32_0 = arith.constant 0 : i32
    return %arg0, %c0_i32 : i32, i32
  }
  func.func @transform_1(%arg0: i32) -> (i32, i32) {
    %c0_i32 = arith.constant 0 : i32
    %c0_i32_0 = arith.constant 0 : i32
    %c0_i32_1 = arith.constant 0 : i32
    return %c0_i32, %c0_i32_0 : i32, i32
  }
  func.func @transform_2(%arg0: i32) -> (i32, i32) {
    %c0_i32 = arith.constant 0 : i32
    %c0_i32_0 = arith.constant 0 : i32
    %c0_i32_1 = arith.constant 0 : i32
    return %c0_i32, %c0_i32_0 : i32, i32
  }
  func.func @transform_3(%arg0: i32) -> (i32, i32) {
    %c0_i32 = arith.constant 0 : i32
    %c0_i32_0 = arith.constant 0 : i32
    %c0_i32_1 = arith.constant 0 : i32
    return %c0_i32, %c0_i32_0 : i32, i32
  }
  func.func @transform_4(%arg0: i32) -> (i32, i32) {
    %c0_i32 = arith.constant 0 : i32
    %c0_i32_0 = arith.constant 0 : i32
    %c0_i32_1 = arith.constant 0 : i32
    return %c0_i32, %c0_i32_0 : i32, i32
  }
  func.func @transform_5(%arg0: i32) -> (i32, i32) {
    %c0_i32 = arith.constant 0 : i32
    %c0_i32_0 = arith.constant 0 : i32
    %c0_i32_1 = arith.constant 0 : i32
    return %c0_i32, %c0_i32_0 : i32, i32
  }
  func.func @transform_6(%arg0: i32) -> (i32, i32) {
    %c0_i32 = arith.constant 0 : i32
    %c0_i32_0 = arith.constant 0 : i32
    %c0_i32_1 = arith.constant 0 : i32
    return %c0_i32, %c0_i32_0 : i32, i32
  }
  func.func @transform_7(%arg0: i32) -> (i32, i32) {
    %c0_i32 = arith.constant 0 : i32
    %c0_i32_0 = arith.constant 0 : i32
    return %c0_i32, %arg0 : i32, i32
  }
}

</mosaic_0001>

<llo_original>
// kernel: tpu_custom_call.1
$region0: #{tpu_custom_call.1}
  #allocation0 [shape = 'u32[]', space=smem, size = 0x4, offset = 0x4, fixed_abs, tag = 'smem constant byte address 0x4 - core index']
  #allocation1 [shape = 'u32[144,128]{1,0:T(1,128)}', space=vmem, size = 0x12000, scoped, tag = 'internal scratch']
  %s0 = inlined_call_operand.vmem [shape: f32[256,16], index: 0, kind: input, shape index: {}]
  %s1 = inlined_call_operand.vmem [shape: bf16[32,16], index: 1, kind: input, shape index: {}]
  %s2 = inlined_call_operand.vmem [shape: f32[32,1], index: 2, kind: input, shape index: {}]
  %s3 = inlined_call_operand.vmem [shape: bf16[32,32], index: 3, kind: input, shape index: {}]
  %s4 = inlined_call_operand.vmem [shape: f32[32,1], index: 4, kind: input, shape index: {}]
  %s5 = inlined_call_operand.vmem [shape: bf16[4,32], index: 5, kind: input, shape index: {}]
  %s6 = inlined_call_operand.vmem [shape: f32[4,1], index: 6, kind: input, shape index: {}]
  %s7 = inlined_call_operand.hbm [shape: f32[4,256], index: 7, kind: output, shape index: {}]
  %s8 = sld [smem:[#allocation0]]
  $region61: #{tpu_custom_call.1} parent=0
    _
  %s10 = ssub.s32 1, %s8
  %s11 = scalar_select 0, %s10, %s8
  $region1: #{tpu_custom_call.1} parent=0
    #allocation2 [shape = 'u8[4096]{0}', space=vmem, size = 0x1000, scoped, tag = 'output window, operand 0']
    #allocation3 [shape = 's32[2]{0}', space=sflag, size = 0x8, scoped, tag = 'scoped memory for tpu_custom_call.1']
    %12 = vsyncpa [#allocation3], 0
    %s13 = scalar_lea.sflag [#allocation3], 1
    %14 = vsyncpa %s13, 0
    loop: start=0, step=1, limit=4
    $region2: #{tpu_custom_call.1} parent=1 // loop_pre_header
      _
    $region3: #{tpu_custom_call.1} parent=1 // loop_header
      %s16 = sphi 0, %s20
      %p17 = scmp.ge.s32.totalorder %s16, 4
      %s26 = sphi 0, %s28
      %s29 = sphi 0, %s26
      %s30 = sphi 0, %s29
      %s46 = sphi 0, %s30
      %s50 = sphi 0, %s50
      %s52 = sphi 0, %s50
      %s53 = sphi 0, %s52
      %s67 = sphi 0, %s53
      %s71 = sphi 0, %s71
      %s73 = sphi 0, %s71
      %s74 = sphi 0, %s73
      %s88 = sphi 0, %s74
      %s92 = sphi 0, %s92
      %s94 = sphi 0, %s92
      %s95 = sphi 0, %s94
      %s109 = sphi 0, %s95
      %s113 = sphi 0, %s113
      %s115 = sphi 0, %s113
      %s116 = sphi 0, %s115
      %s130 = sphi 0, %s116
      %s134 = sphi 0, %s134
      %s136 = sphi 0, %s134
      %s137 = sphi 0, %s136
      %s151 = sphi 0, %s137
      %s155 = sphi 0, %s155
      %s157 = sphi 0, %s155
      %s158 = sphi 0, %s157
      %s172 = sphi 0, %s158
      %s178 = sphi 0, %s180
      %s181 = sphi 0, %s178
      %s182 = sphi 0, %s181
      %s198 = sphi 0, %s182
    $region4: #{tpu_custom_call.1} parent=1 // loop_header_branch
      %19 = sbr.rel (%p17) target = $region8
    $region5: #{tpu_custom_call.1} parent=1 // loop_body
      %s21 = ssub.s32 %s16, 1
      %s22 = ssub.s32 %s16, 2
      %s23 = sadd.s32 %s16, 1
      %s24 = ssub.s32 %s16, %s23
      %p25 = scmp.eq.s32.totalorder %s24, 0
      %s27 = sadd.s32 %s26, 1
      %s28 = scalar_select %p25, %s26, %s27
      %p31 = pneg %p25
      %p32 = scmp.eq.s32.totalorder %s16, 1
      %p33 = por %p31, %p32
      %p34 = scmp.ne.s32.totalorder %s26, %s29
      %p35 = scmp.eq.s32.totalorder %s16, 0
      %p36 = por %p34, %p35
      %p37 = scmp.ne.s32.totalorder %s26, %s29
      %p38 = scmp.eq.s32.totalorder %s21, 1
      %p39 = por %p37, %p38
      %p40 = scmp.ne.s32.totalorder %s29, %s30
      %p41 = scmp.eq.s32.totalorder %s21, 0
      %p42 = por %p40, %p41
      %p43 = scmp.ne.s32.totalorder %s29, %s30
      %p44 = scmp.eq.s32.totalorder %s22, 1
      %p45 = por %p43, %p44
      %p47 = scmp.ne.s32.totalorder %s30, %s46
      %p48 = scmp.eq.s32.totalorder %s22, 0
      %p49 = por %p47, %p48
      %s51 = sadd.s32 %s50, 1
      %p54 = scmp.eq.s32.totalorder %s16, 1
      %p55 = scmp.ne.s32.totalorder %s50, %s52
      %p56 = scmp.eq.s32.totalorder %s16, 0
      %p57 = por %p55, %p56
      %p58 = scmp.ne.s32.totalorder %s50, %s52
      %p59 = scmp.eq.s32.totalorder %s21, 1
      %p60 = por %p58, %p59
      %p61 = scmp.ne.s32.totalorder %s52, %s53
      %p62 = scmp.eq.s32.totalorder %s21, 0
      %p63 = por %p61, %p62
      %p64 = scmp.ne.s32.totalorder %s52, %s53
      %p65 = scmp.eq.s32.totalorder %s22, 1
      %p66 = por %p64, %p65
      %p68 = scmp.ne.s32.totalorder %s53, %s67
      %p69 = scmp.eq.s32.totalorder %s22, 0
      %p70 = por %p68, %p69
      %s72 = sadd.s32 %s71, 1
      %p75 = scmp.eq.s32.totalorder %s16, 1
      %p76 = scmp.ne.s32.totalorder %s71, %s73
      %p77 = scmp.eq.s32.totalorder %s16, 0
      %p78 = por %p76, %p77
      %p79 = scmp.ne.s32.totalorder %s71, %s73
      %p80 = scmp.eq.s32.totalorder %s21, 1
      %p81 = por %p79, %p80
      %p82 = scmp.ne.s32.totalorder %s73, %s74
      %p83 = scmp.eq.s32.totalorder %s21, 0
      %p84 = por %p82, %p83
      %p85 = scmp.ne.s32.totalorder %s73, %s74
      %p86 = scmp.eq.s32.totalorder %s22, 1
      %p87 = por %p85, %p86
      %p89 = scmp.ne.s32.totalorder %s74, %s88
      %p90 = scmp.eq.s32.totalorder %s22, 0
      %p91 = por %p89, %p90
      %s93 = sadd.s32 %s92, 1
      %p96 = scmp.eq.s32.totalorder %s16, 1
      %p97 = scmp.ne.s32.totalorder %s92, %s94
      %p98 = scmp.eq.s32.totalorder %s16, 0
      %p99 = por %p97, %p98
      %p100 = scmp.ne.s32.totalorder %s92, %s94
      %p101 = scmp.eq.s32.totalorder %s21, 1
      %p102 = por %p100, %p101
      %p103 = scmp.ne.s32.totalorder %s94, %s95
      %p104 = scmp.eq.s32.totalorder %s21, 0
      %p105 = por %p103, %p104
      %p106 = scmp.ne.s32.totalorder %s94, %s95
      %p107 = scmp.eq.s32.totalorder %s22, 1
      %p108 = por %p106, %p107
      %p110 = scmp.ne.s32.totalorder %s95, %s109
      %p111 = scmp.eq.s32.totalorder %s22, 0
      %p112 = por %p110, %p111
      %s114 = sadd.s32 %s113, 1
      %p117 = scmp.eq.s32.totalorder %s16, 1
      %p118 = scmp.ne.s32.totalorder %s113, %s115
      %p119 = scmp.eq.s32.totalorder %s16, 0
      %p120 = por %p118, %p119
      %p121 = scmp.ne.s32.totalorder %s113, %s115
      %p122 = scmp.eq.s32.totalorder %s21, 1
      %p123 = por %p121, %p122
      %p124 = scmp.ne.s32.totalorder %s115, %s116
      %p125 = scmp.eq.s32.totalorder %s21, 0
      %p126 = por %p124, %p125
      %p127 = scmp.ne.s32.totalorder %s115, %s116
      %p128 = scmp.eq.s32.totalorder %s22, 1
      %p129 = por %p127, %p128
      %p131 = scmp.ne.s32.totalorder %s116, %s130
      %p132 = scmp.eq.s32.totalorder %s22, 0
      %p133 = por %p131, %p132
      %s135 = sadd.s32 %s134, 1
      %p138 = scmp.eq.s32.totalorder %s16, 1
      %p139 = scmp.ne.s32.totalorder %s134, %s136
      %p140 = scmp.eq.s32.totalorder %s16, 0
      %p141 = por %p139, %p140
      %p142 = scmp.ne.s32.totalorder %s134, %s136
      %p143 = scmp.eq.s32.totalorder %s21, 1
      %p144 = por %p142, %p143
      %p145 = scmp.ne.s32.totalorder %s136, %s137
      %p146 = scmp.eq.s32.totalorder %s21, 0
      %p147 = por %p145, %p146
      %p148 = scmp.ne.s32.totalorder %s136, %s137
      %p149 = scmp.eq.s32.totalorder %s22, 1
      %p150 = por %p148, %p149
      %p152 = scmp.ne.s32.totalorder %s137, %s151
      %p153 = scmp.eq.s32.totalorder %s22, 0
      %p154 = por %p152, %p153
      %s156 = sadd.s32 %s155, 1
      %p159 = scmp.eq.s32.totalorder %s16, 1
      %p160 = scmp.ne.s32.totalorder %s155, %s157
      %p161 = scmp.eq.s32.totalorder %s16, 0
      %p162 = por %p160, %p161
      %p163 = scmp.ne.s32.totalorder %s155, %s157
      %p164 = scmp.eq.s32.totalorder %s21, 1
      %p165 = por %p163, %p164
      %p166 = scmp.ne.s32.totalorder %s157, %s158
      %p167 = scmp.eq.s32.totalorder %s21, 0
      %p168 = por %p166, %p167
      %p169 = scmp.ne.s32.totalorder %s157, %s158
      %p170 = scmp.eq.s32.totalorder %s22, 1
      %p171 = por %p169, %p170
      %p173 = scmp.ne.s32.totalorder %s158, %s172
      %p174 = scmp.eq.s32.totalorder %s22, 0
      %p175 = por %p173, %p174
      %s176 = ssub.s32 %s16, %s23
      %p177 = scmp.eq.s32.totalorder %s176, 0
      %s179 = sadd.s32 %s178, 1
      %s180 = scalar_select %p177, %s178, %s179
      %p183 = pneg %p177
      %p184 = scmp.eq.s32.totalorder %s16, 1
      %p185 = por %p183, %p184
      %p186 = scmp.ne.s32.totalorder %s178, %s181
      %p187 = scmp.eq.s32.totalorder %s16, 0
      %p188 = por %p186, %p187
      %p189 = scmp.ne.s32.totalorder %s178, %s181
      %p190 = scmp.eq.s32.totalorder %s21, 1
      %p191 = por %p189, %p190
      %p192 = scmp.ne.s32.totalorder %s181, %s182
      %p193 = scmp.eq.s32.totalorder %s21, 0
      %p194 = por %p192, %p193
      %p195 = scmp.ne.s32.totalorder %s181, %s182
      %p196 = scmp.eq.s32.totalorder %s22, 1
      %p197 = por %p195, %p196
      %p199 = scmp.ne.s32.totalorder %s182, %s198
      %p200 = scmp.eq.s32.totalorder %s22, 0
      %p201 = por %p199, %p200
      %p202 = scmp.le.s32.totalorder 1, %s16
      %p203 = scmp.lt.s32.totalorder %s16, 3
      %p204 = pnand %p202, %p203
      %p205 = pneg %p204
      // Predicated region
      $region9: #{tpu_custom_call.1} parent=5 // pred_check
        _
      $region10: #{tpu_custom_call.1} parent=5 // pred_check_branch
        %207 = sbr.rel (%p204) target = $region12
      $region11: #{tpu_custom_call.1} parent=5 // pred_region
        %s208 = ssub.s32 %s16, 1
        // Predicated region
        $region13: #{tpu_custom_call.1} parent=11 // pred_check
          %p209 = pneg %p63
        $region14: #{tpu_custom_call.1} parent=11 // pred_check_branch
          %211 = sbr.rel (%p209) target = $region16
        $region15: #{tpu_custom_call.1} parent=11 // pred_region
          _
        $region16: #{tpu_custom_call.1} parent=11 // pred_fallthru
          _
        // Predicated region
        $region17: #{tpu_custom_call.1} parent=11 // pred_check
          %p212 = pneg %p84
        $region18: #{tpu_custom_call.1} parent=11 // pred_check_branch
          %214 = sbr.rel (%p212) target = $region20
        $region19: #{tpu_custom_call.1} parent=11 // pred_region
          _
        $region20: #{tpu_custom_call.1} parent=11 // pred_fallthru
          _
        // Predicated region
        $region21: #{tpu_custom_call.1} parent=11 // pred_check
          %p215 = pneg %p105
        $region22: #{tpu_custom_call.1} parent=11 // pred_check_branch
          %217 = sbr.rel (%p215) target = $region24
        $region23: #{tpu_custom_call.1} parent=11 // pred_region
          _
        $region24: #{tpu_custom_call.1} parent=11 // pred_fallthru
          _
        // Predicated region
        $region25: #{tpu_custom_call.1} parent=11 // pred_check
          %p218 = pneg %p126
        $region26: #{tpu_custom_call.1} parent=11 // pred_check_branch
          %220 = sbr.rel (%p218) target = $region28
        $region27: #{tpu_custom_call.1} parent=11 // pred_region
          _
        $region28: #{tpu_custom_call.1} parent=11 // pred_fallthru
          _
        // Predicated region
        $region29: #{tpu_custom_call.1} parent=11 // pred_check
          %p221 = pneg %p147
        $region30: #{tpu_custom_call.1} parent=11 // pred_check_branch
          %223 = sbr.rel (%p221) target = $region32
        $region31: #{tpu_custom_call.1} parent=11 // pred_region
          _
        $region32: #{tpu_custom_call.1} parent=11 // pred_fallthru
          _
        // Predicated region
        $region33: #{tpu_custom_call.1} parent=11 // pred_check
          %p224 = pneg %p168
        $region34: #{tpu_custom_call.1} parent=11 // pred_check_branch
          %226 = sbr.rel (%p224) target = $region36
        $region35: #{tpu_custom_call.1} parent=11 // pred_region
          _
        $region36: #{tpu_custom_call.1} parent=11 // pred_fallthru
          _
      $region12: #{tpu_custom_call.1} parent=5 // pred_fallthru
        _
      %p227 = scmp.lt.s32.totalorder %s16, 2
      // Predicated region
      $region37: #{tpu_custom_call.1} parent=5 // pred_check
        %p228 = pneg %p227
      $region38: #{tpu_custom_call.1} parent=5 // pred_check_branch
        %230 = sbr.rel (%p228) target = $region40
      $region39: #{tpu_custom_call.1} parent=5 // pred_region
        // Predicated region
        $region41: #{tpu_custom_call.1} parent=39 // pred_check
          %p231 = pneg %p36
        $region42: #{tpu_custom_call.1} parent=39 // pred_check_branch
          %233 = sbr.rel (%p231) target = $region44
        $region43: #{tpu_custom_call.1} parent=39 // pred_region
          %s234 = smul.u32 16, %s16
          %p235 = scmp.lt.s32.totalorder %s234, 31
          %s236 = scalar_select %p235, %s234, 31
          %s237 = smul.addr %s236, 8
          %s238 = scalar_lea.vmem %s0, %s237
          %s239 = smul.u32 16, %s16
        $region44: #{tpu_custom_call.1} parent=39 // pred_fallthru
          _
      $region40: #{tpu_custom_call.1} parent=5 // pred_fallthru
        _
      %p240 = scmp.le.s32.totalorder 1, %s16
      %p241 = scmp.lt.s32.totalorder %s16, 3
      %p242 = pnand %p240, %p241
      %p243 = pneg %p242
      // Predicated region
      $region45: #{tpu_custom_call.1} parent=5 // pred_check
        _
      $region46: #{tpu_custom_call.1} parent=5 // pred_check_branch
        %245 = sbr.rel (%p242) target = $region48
      $region47: #{tpu_custom_call.1} parent=5 // pred_region
        %s246 = ssub.s32 %s16, 1
        %s247 = smul.u32 16, %s21
        %p248 = scmp.lt.s32.totalorder %s247, 31
        %s249 = scalar_select %p248, %s247, 31
        %s250 = smul.addr %s249, 8
        %s251 = scalar_lea.vmem %s0, %s250
        %p252 = pneg %p42
        %p253 = pneg %p39
        %p254 = pneg %p63
        %p255 = pneg %p60
        %p256 = pneg %p84
        %p257 = pneg %p81
        %p258 = pneg %p105
        %p259 = pneg %p102
        %p260 = pneg %p126
        %p261 = pneg %p123
        %p262 = pneg %p147
        %p263 = pneg %p144
        %p264 = pneg %p168
        %p265 = pneg %p165
        %p266 = pneg %p194
        %p267 = pneg %p191
        %s268 = sand.u32 %s181, 1
        %s269 = scalar_lea.sflag [#allocation3], %s268
        %s270 = sand.u32 %s181, 1
        %s271 = smul.addr %s270, 4
        %s272 = scalar_lea.vmem [#allocation2], %s271
        %s273 = smul.u32 16, %s21
        %p274 = scmp.lt.s32.totalorder %s273, 31
        %s275 = scalar_select %p274, %s273, 31
        %s276 = smul.addr %s275, 8
        %s277 = scalar_lea.vmem %s0, %s276
        %s278 = smul.u32 16, %s21
        %v280 = vld [vmem:[%s277] sm:$0xff]
        %v281 = vld [vmem:[%s277 + $0x8] sm:$0xff]
        %v282 = vld [vmem:[%s277 + $0x10] sm:$0xff]
        %v283 = vld [vmem:[%s277 + $0x18] sm:$0xff]
        %v284 = vld [vmem:[%s277 + $0x20] sm:$0xff]
        %v285 = vld [vmem:[%s277 + $0x28] sm:$0xff]
        %v286 = vld [vmem:[%s277 + $0x30] sm:$0xff]
        %v287 = vld [vmem:[%s277 + $0x38] sm:$0xff]
        %v288 = vld [vmem:[%s277 + $0x40] sm:$0xff]
        %v289 = vld [vmem:[%s277 + $0x48] sm:$0xff]
        %v290 = vld [vmem:[%s277 + $0x50] sm:$0xff]
        %v291 = vld [vmem:[%s277 + $0x58] sm:$0xff]
        %v292 = vld [vmem:[%s277 + $0x60] sm:$0xff]
        %v293 = vld [vmem:[%s277 + $0x68] sm:$0xff]
        %v294 = vld [vmem:[%s277 + $0x70] sm:$0xff]
        %v295 = vld [vmem:[%s277 + $0x78] sm:$0xff]
        %v296 = vpack.c.bf16 %v281, %v280
        %v297 = vpack.c.bf16 %v283, %v282
        %v298 = vpack.c.bf16 %v285, %v284
        %v299 = vpack.c.bf16 %v287, %v286
        %v300 = vpack.c.bf16 %v289, %v288
        %v301 = vpack.c.bf16 %v291, %v290
        %v302 = vpack.c.bf16 %v293, %v292
        %v303 = vpack.c.bf16 %v295, %v294
        %v304 = vld [vmem:[%s1] sm:$0xf]
        %v305 = vld [vmem:[%s1 + $0x4] sm:$0xf]
        %v306 = vld [vmem:[%s1 + $0x8] sm:$0xf]
        %v307 = vld [vmem:[%s1 + $0xc] sm:$0xf]
        %v308 = vld [vmem:[%s2] sm:$0xff]
        %v309 = vld [vmem:[%s2 + $0x8] sm:$0xff]
        %v310 = vld [vmem:[%s2 + $0x10] sm:$0xff]
        %v311 = vld [vmem:[%s2 + $0x18] sm:$0xff]
        %313 = vset.pattern.permute.xlu0 0
        %314 = vperm.xlu0 %313, %v308
        %v315 = vpop.permute.xlu0 %314
        %318 = vset.pattern.permute.xlu0 0
        %319 = vperm.xlu0 %318, %v309
        %v320 = vpop.permute.xlu0 %319
        %323 = vset.pattern.permute.xlu0 0
        %324 = vperm.xlu0 %323, %v310
        %v325 = vpop.permute.xlu0 %324
        %328 = vset.pattern.permute.xlu0 0
        %329 = vperm.xlu0 %328, %v311
        %v330 = vpop.permute.xlu0 %329
        %v336 = vunpack.c.l.b16 %v304
        %v337 = vunpack.c.l.b16 %v305
        %v338 = vunpack.c.l.b16 %v306
        %v339 = vunpack.c.l.b16 %v307
        %v340 = vpack.c.b16 %v337, %v336
        %v341 = vpack.c.b16 %v339, %v338
        %vm342 = vcmask 130048
        %v344 = vsel %vm342, %v340, 0
        %v347 = vsel %vm342, %v341, 0
        %v350 = vsel %vm342, %v296, 0
        %v353 = vsel %vm342, %v297, 0
        %v356 = vsel %vm342, %v298, 0
        %v359 = vsel %vm342, %v299, 0
        %v362 = vsel %vm342, %v300, 0
        %v365 = vsel %vm342, %v301, 0
        %v368 = vsel %vm342, %v302, 0
        %v371 = vsel %vm342, %v303, 0
        %373 = vmatprep.subr.bf16.mxu0 0
        %374 = vmatpush1.bf16.xpose.msra.mxu0 %v350
        %375 = vmatprep.subr.bf16.mxu0 0
        %376 = vmatpush1.bf16.xpose.msra.mxu0 %v353
        %377 = vmatprep.subr.bf16.mxu0 0
        %378 = vmatpush1.bf16.xpose.msra.mxu0 %v356
        %379 = vmatprep.subr.bf16.mxu0 0
        %380 = vmatpush1.bf16.xpose.msra.mxu0 %v359
        %381 = vmatprep.subr.bf16.mxu0 0
        %382 = vmatpush1.bf16.xpose.msra.mxu0 %v362
        %383 = vmatprep.subr.bf16.mxu0 0
        %384 = vmatpush1.bf16.xpose.msra.mxu0 %v365
        %385 = vmatprep.subr.bf16.mxu0 0
        %386 = vmatpush1.bf16.xpose.msra.mxu0 %v368
        %387 = vmatprep.subr.bf16.mxu0 0
        %388 = vmatpush1.bf16.xpose.msra.mxu0 %v371
        %389 = vmatprep.subr.bf16.mxu0 0
        %390 = vmatpush1.bf16.xpose.msra.mxu0 0
        %391 = vmatprep.subr.bf16.mxu0 0
        %392 = vmatpush1.bf16.xpose.msra.mxu0 0
        %393 = vmatprep.subr.bf16.mxu0 0
        %394 = vmatpush1.bf16.xpose.msra.mxu0 0
        %395 = vmatprep.subr.bf16.mxu0 0
        %396 = vmatpush1.bf16.xpose.msra.mxu0 0
        %397 = vmatprep.subr.bf16.mxu0 0
        %398 = vmatpush1.bf16.xpose.msra.mxu0 0
        %399 = vmatprep.subr.bf16.mxu0 0
        %400 = vmatpush1.bf16.xpose.msra.mxu0 0
        %401 = vmatprep.subr.bf16.mxu0 0
        %402 = vmatpush1.bf16.xpose.msra.mxu0 0
        %403 = vmatprep.subr.bf16.mxu0 0
        %404 = vmatpush1.bf16.xpose.msra.mxu0 0
        %405 = vmatprep.mubr.bf16.mxu0 0
        %406 = vmatmul.mubr.bf16.gmra.mrb[0].mxu0 %v344
        %v407 = vpop.f32.mrb[0].mxu0
        %v408 = vadd.f32 %v315, %v407
        %v409 = vpop.f32.mrb[0].mxu0
        %v410 = vpop.f32.mrb[0].mxu0
        %v411 = vadd.f32 %v320, %v410
        %v412 = vpop.f32.mrb[0].mxu0
        %413 = vmatprep.mubr.bf16.mxu0 0
        %414 = vmatmul.mubr.bf16.gmra.mrb[0].mxu0 %v347
        %v415 = vpop.f32.mrb[0].mxu0
        %v416 = vadd.f32 %v325, %v415
        %v417 = vpop.f32.mrb[0].mxu0
        %v418 = vpop.f32.mrb[0].mxu0
        %v419 = vadd.f32 %v330, %v418
        %v420 = vpop.f32.mrb[0].mxu0
        %421 = vdwg.mxu0
        %v422 = vmax.f32 %v408, 0.0
        %v423 = vmax.f32 %v411, 0.0
        %v424 = vmax.f32 %v416, 0.0
        %v425 = vmax.f32 %v419, 0.0
        %v426 = vpack.c.bf16 %v423, %v422
        %v427 = vpack.c.bf16 %v425, %v424
        %v428 = vld [vmem:[%s3] sm:$0xf]
        %v429 = vld [vmem:[%s3 + $0x4] sm:$0xf]
        %v430 = vld [vmem:[%s3 + $0x8] sm:$0xf]
        %v431 = vld [vmem:[%s3 + $0xc] sm:$0xf]
        %v432 = vld [vmem:[%s4] sm:$0xff]
        %v433 = vld [vmem:[%s4 + $0x8] sm:$0xff]
        %v434 = vld [vmem:[%s4 + $0x10] sm:$0xff]
        %v435 = vld [vmem:[%s4 + $0x18] sm:$0xff]
        %437 = vset.pattern.permute.xlu0 0
        %438 = vperm.xlu0 %437, %v432
        %v439 = vpop.permute.xlu0 %438
        %442 = vset.pattern.permute.xlu0 0
        %443 = vperm.xlu0 %442, %v433
        %v444 = vpop.permute.xlu0 %443
        %447 = vset.pattern.permute.xlu0 0
        %448 = vperm.xlu0 %447, %v434
        %v449 = vpop.permute.xlu0 %448
        %452 = vset.pattern.permute.xlu0 0
        %453 = vperm.xlu0 %452, %v435
        %v454 = vpop.permute.xlu0 %453
        %v460 = vunpack.c.l.b16 %v428
        %v461 = vunpack.c.l.b16 %v429
        %v462 = vunpack.c.l.b16 %v430
        %v463 = vunpack.c.l.b16 %v431
        %v464 = vpack.c.b16 %v461, %v460
        %v465 = vpack.c.b16 %v463, %v462
        %vm466 = vcmask 261120
        %v468 = vsel %vm466, %v464, 0
        %v471 = vsel %vm466, %v465, 0
        %473 = vmatprep.subr.bf16.mxu0 0
        %474 = vmatpush1.bf16.msra.mxu0 %v426
        %475 = vmatprep.subr.bf16.mxu0 0
        %476 = vmatpush1.bf16.msra.mxu0 %v427
        %477 = vmatprep.subr.bf16.mxu0 0
        %478 = vmatpush1.bf16.msra.mxu0 0
        %479 = vmatprep.subr.bf16.mxu0 0
        %480 = vmatpush1.bf16.msra.mxu0 0
        %481 = vmatprep.subr.bf16.mxu0 0
        %482 = vmatpush1.bf16.msra.mxu0 0
        %483 = vmatprep.subr.bf16.mxu0 0
        %484 = vmatpush1.bf16.msra.mxu0 0
        %485 = vmatprep.subr.bf16.mxu0 0
        %486 = vmatpush1.bf16.msra.mxu0 0
        %487 = vmatprep.subr.bf16.mxu0 0
        %488 = vmatpush1.bf16.msra.mxu0 0
        %489 = vmatprep.subr.bf16.mxu0 0
        %490 = vmatpush1.bf16.msra.mxu0 0
        %491 = vmatprep.subr.bf16.mxu0 0
        %492 = vmatpush1.bf16.msra.mxu0 0
        %493 = vmatprep.subr.bf16.mxu0 0
        %494 = vmatpush1.bf16.msra.mxu0 0
        %495 = vmatprep.subr.bf16.mxu0 0
        %496 = vmatpush1.bf16.msra.mxu0 0
        %497 = vmatprep.subr.bf16.mxu0 0
        %498 = vmatpush1.bf16.msra.mxu0 0
        %499 = vmatprep.subr.bf16.mxu0 0
        %500 = vmatpush1.bf16.msra.mxu0 0
        %501 = vmatprep.subr.bf16.mxu0 0
        %502 = vmatpush1.bf16.msra.mxu0 0
        %503 = vmatprep.subr.bf16.mxu0 0
        %504 = vmatpush1.bf16.msra.mxu0 0
        %505 = vmatprep.mubr.bf16.mxu0 0
        %506 = vmatmul.mubr.bf16.gmra.mrb[0].mxu0 %v468
        %v507 = vpop.f32.mrb[0].mxu0
        %v508 = vadd.f32 %v439, %v507
        %v509 = vpop.f32.mrb[0].mxu0
        %v510 = vpop.f32.mrb[0].mxu0
        %v511 = vadd.f32 %v444, %v510
        %v512 = vpop.f32.mrb[0].mxu0
        %513 = vmatprep.mubr.bf16.mxu0 0
        %514 = vmatmul.mubr.bf16.gmra.mrb[0].mxu0 %v471
        %v515 = vpop.f32.mrb[0].mxu0
        %v516 = vadd.f32 %v449, %v515
        %v517 = vpop.f32.mrb[0].mxu0
        %v518 = vpop.f32.mrb[0].mxu0
        %v519 = vadd.f32 %v454, %v518
        %v520 = vpop.f32.mrb[0].mxu0
        %521 = vdwg.mxu0
        %v522 = vmax.f32 %v508, 0.0
        %v523 = vmax.f32 %v511, 0.0
        %v524 = vmax.f32 %v516, 0.0
        %v525 = vmax.f32 %v519, 0.0
        %v526 = vpack.c.bf16 %v523, %v522
        %v527 = vpack.c.bf16 %v525, %v524
        %v528 = vld [vmem:[%s5] sm:$0x3]
        %v529 = vld [vmem:[%s6] sm:$0xf]
        %531 = vset.pattern.permute.xlu0 0
        %532 = vperm.xlu0 %531, %v529
        %v533 = vpop.permute.xlu0 %532
        %v536 = vsel %vm466, %v528, 0
        %538 = vmatprep.subr.bf16.mxu0 0
        %539 = vmatpush1.bf16.msra.mxu0 %v526
        %540 = vmatprep.subr.bf16.mxu0 0
        %541 = vmatpush1.bf16.msra.mxu0 %v527
        %542 = vmatprep.subr.bf16.mxu0 0
        %543 = vmatpush1.bf16.msra.mxu0 0
        %544 = vmatprep.subr.bf16.mxu0 0
        %545 = vmatpush1.bf16.msra.mxu0 0
        %546 = vmatprep.subr.bf16.mxu0 0
        %547 = vmatpush1.bf16.msra.mxu0 0
        %548 = vmatprep.subr.bf16.mxu0 0
        %549 = vmatpush1.bf16.msra.mxu0 0
        %550 = vmatprep.subr.bf16.mxu0 0
        %551 = vmatpush1.bf16.msra.mxu0 0
        %552 = vmatprep.subr.bf16.mxu0 0
        %553 = vmatpush1.bf16.msra.mxu0 0
        %554 = vmatprep.subr.bf16.mxu0 0
        %555 = vmatpush1.bf16.msra.mxu0 0
        %556 = vmatprep.subr.bf16.mxu0 0
        %557 = vmatpush1.bf16.msra.mxu0 0
        %558 = vmatprep.subr.bf16.mxu0 0
        %559 = vmatpush1.bf16.msra.mxu0 0
        %560 = vmatprep.subr.bf16.mxu0 0
        %561 = vmatpush1.bf16.msra.mxu0 0
        %562 = vmatprep.subr.bf16.mxu0 0
        %563 = vmatpush1.bf16.msra.mxu0 0
        %564 = vmatprep.subr.bf16.mxu0 0
        %565 = vmatpush1.bf16.msra.mxu0 0
        %566 = vmatprep.subr.bf16.mxu0 0
        %567 = vmatpush1.bf16.msra.mxu0 0
        %568 = vmatprep.subr.bf16.mxu0 0
        %569 = vmatpush1.bf16.msra.mxu0 0
        %570 = vmatprep.mubr.bf16.mxu0 0
        %571 = vmatmul.mubr.bf16.gmra.mrb[0].mxu0 %v536
        %v572 = vpop.f32.mrb[0].mxu0
        %v573 = vadd.f32 %v533, %v572
        %v574 = vpop.f32.mrb[0].mxu0
        %v575 = vpop.f32.mrb[0].mxu0
        %v576 = vpop.f32.mrb[0].mxu0
        %577 = vdwg.mxu0
        %578 = vst [vmem:[%s272] sm:$0xf] %v573
        %s579 = sand.u32 %s181, 1
        %s580 = scalar_lea.sflag [#allocation3], %s579
        %s581 = sand.u32 %s181, 1
        %s582 = smul.addr %s581, 4
        %s583 = scalar_lea.vmem [#allocation2], %s582
        // Predicated region
        $region49: #{tpu_custom_call.1} parent=47 // pred_check
          %p584 = pneg %p191
        $region50: #{tpu_custom_call.1} parent=47 // pred_check_branch
          %586 = sbr.rel (%p584) target = $region52
        $region51: #{tpu_custom_call.1} parent=47 // pred_region
          %s588 = ssub.s32 64, 64
          %589 = vsyncadd %s580, %s588
          %s590 = smul.addr %s21, 64
          %s591 = scalar_lea.hbm %s7, %s590
          %s593 = sshll.u32 %s583, 4
          %s594 = int_to_ptr.vmem [resolvable:$true] %s593
          %596 = dma.vmem_to_hbm [thread:$0]  %s594, 64, %s591, %s580
        $region52: #{tpu_custom_call.1} parent=47 // pred_fallthru
          _
      $region48: #{tpu_custom_call.1} parent=5 // pred_fallthru
        _
      %p597 = scmp.le.s32.totalorder 2, %s16
      // Predicated region
      $region53: #{tpu_custom_call.1} parent=5 // pred_check
        %p598 = pneg %p597
      $region54: #{tpu_custom_call.1} parent=5 // pred_check_branch
        %600 = sbr.rel (%p598) target = $region56
      $region55: #{tpu_custom_call.1} parent=5 // pred_region
        %s601 = ssub.s32 %s16, 2
        // Predicated region
        $region57: #{tpu_custom_call.1} parent=55 // pred_check
          %p602 = pneg %p197
        $region58: #{tpu_custom_call.1} parent=55 // pred_check_branch
          %604 = sbr.rel (%p602) target = $region60
        $region59: #{tpu_custom_call.1} parent=55 // pred_region
          %s605 = sand.u32 %s182, 1
          %s606 = scalar_lea.sflag [#allocation3], %s605
          %s607 = sand.u32 %s182, 1
          %s608 = smul.addr %s607, 4
          %s609 = scalar_lea.vmem [#allocation2], %s608
          %610 = dma.done %s606, 64
        $region60: #{tpu_custom_call.1} parent=55 // pred_fallthru
          _
      $region56: #{tpu_custom_call.1} parent=5 // pred_fallthru
        _
    $region6: #{tpu_custom_call.1} parent=1 // loop_footer
      %s20 = sadd.s32 1, %s16
    $region7: #{tpu_custom_call.1} parent=1 // loop_footer_branch
      %15 = sbr.rel target = $region3
    $region8: #{tpu_custom_call.1} parent=1 // loop_exit
      _
    %611 = vsyncpa [#allocation3], 1
    %s612 = scalar_lea.sflag [#allocation3], 1
    %613 = vsyncpa %s612, 1

</llo_original>
